<compile_context>
chip_gen: v7x
topology: tpu7x:2x2x1
jax: 0.10.0
libtpu: 0.0.40
codegen_flags: <defaults>
</compile_context>

<pallas_src>
import jax
import jax.numpy as jnp
from jax.experimental import pallas as pl
from jax.experimental.pallas import tpu as pltpu


# Scoped-VMEM ceiling that is safe on every generation (v5e default scoped
# limit is 16 MiB, v7x only has 64 MiB of physical VMEM per TensorCore).
_VMEM_LIMIT_BYTES = 32 * 1024 * 1024
# Budget for the pipelined x / out blocks.  Pallas double-buffers both the
# input block and the output block (~4 block-sized VMEM buffers live at once);
# leave headroom for the (tiny) weights and compiler scratch.
_BLOCK_BUDGET_BYTES = 20 * 1024 * 1024


def _choose_batch_tile(batch, bytes_per_sample):
    """Largest divisor of `batch` whose block fits the VMEM budget, preferring
    to keep >= 2 grid steps (so v7x's two TensorCores both get work)."""
    max_tb = max(1, _BLOCK_BUDGET_BYTES // (4 * bytes_per_sample))
    divisors = [d for d in range(1, batch + 1) if batch % d == 0 and d <= max_tb]
    if not divisors:
        return 1
    two_step = [d for d in divisors if batch // d >= 2]
    return max(two_step) if two_step else max(divisors)


def se_block_kernel(x_ref, w1_ref, b1_ref, w2_ref, b2_ref, o_ref):
    # x_ref / o_ref: (TB, C, HW)  -- NCHW-native, HW on lanes, C on sublanes
    # w1_ref: (C, Cr)  b1_ref: (1, Cr)  w2_ref: (Cr, C)  b2_ref: (1, C)
    x = x_ref[...]                       # stays in the input dtype
    tb, c, hw = x.shape

    # Squeeze: global average pool over the spatial (lane) axis, done as a
    # batched (C, HW) @ (HW, 1) MXU reduction with f32 accumulation so no f32
    # copy of the x block is materialized.  HIGHEST precision keeps the f32
    # reduction accurate (free at this size; the MXU is otherwise idle).
    ones = jnp.ones((tb, hw, 1), dtype=x.dtype)
    pooled = jnp.einsum(
        "bch,bhk->bck",
        x,
        ones,
        preferred_element_type=jnp.float32,
        precision=jax.lax.Precision.HIGHEST,
    )[:, :, 0] * (1.0 / hw)              # (TB, C) f32

    # Excitation: FC -> ReLU -> FC -> Sigmoid (tiny matmuls, M = TB).
    h = jnp.dot(pooled, w1_ref[...], preferred_element_type=jnp.float32)
    h = jnp.maximum(h + b1_ref[...], 0.0)
    y = jnp.dot(h, w2_ref[...], preferred_element_type=jnp.float32)
    y = jax.nn.sigmoid(y + b2_ref[...])  # (TB, C) f32

    # Scale: per-channel (sublane) gate broadcast over the spatial lane axis;
    # elementwise multiply and store stay in the input dtype.
    o_ref[...] = x * y.astype(x.dtype)[:, :, None]


@jax.jit
def se_block(x, w1, b1, w2, b2):
    """SEBlock forward. x: (B, C, H, W) NCHW (PyTorch layout). Returns NCHW."""
    B, C, H, W = x.shape
    HW = H * W
    Cr = w1.shape[1]

    # Contiguous merge of the trailing spatial dims: a free reshape, no
    # transpose / extra HBM traffic.
    x_flat = x.reshape(B, C, HW)
    b1_2d = b1.reshape(1, Cr)
    b2_2d = b2.reshape(1, C)

    tb = _choose_batch_tile(B, C * HW * x.dtype.itemsize)
    grid = (B // tb,)

    # TODO(synk): if a single sample's (C, HW) slab ever exceeds the per-block
    # VMEM budget, add an inner HW-chunk pipeline (pool pass + rescale pass)
    # instead of relying on compiler spills.

    out_flat = pl.pallas_call(
        se_block_kernel,
        out_shape=jax.ShapeDtypeStruct((B, C, HW), x.dtype),
        grid_spec=pltpu.PrefetchScalarGridSpec(
            num_scalar_prefetch=0,
            grid=grid,
            in_specs=[
                pl.BlockSpec((tb, C, HW), lambda i: (i, 0, 0)),
                pl.BlockSpec((C, Cr), lambda i: (0, 0)),
                pl.BlockSpec((1, Cr), lambda i: (0, 0)),
                pl.BlockSpec((Cr, C), lambda i: (0, 0)),
                pl.BlockSpec((1, C), lambda i: (0, 0)),
            ],
            out_specs=pl.BlockSpec((tb, C, HW), lambda i: (i, 0, 0)),
        ),
        compiler_params=pltpu.CompilerParams(
            dimension_semantics=("parallel",),
            vmem_limit_bytes=_VMEM_LIMIT_BYTES,
        ),
    )(x_flat, w1, b1_2d, w2, b2_2d)

    return out_flat.reshape(B, C, H, W)


def se_block_ref(x, w1, b1, w2, b2):
    """Pure-JAX reference matching the PyTorch module."""
    pooled = jnp.mean(x.astype(jnp.float32), axis=(2, 3))   # (B, C)
    h = jnp.maximum(pooled @ w1 + b1, 0.0)                   # (B, Cr)
    y = jax.nn.sigmoid(h @ w2 + b2)                          # (B, C)
    return x * y[:, :, None, None]


if __name__ == "__main__":
    # Small shapes consistent with the module: in_channels=32, reduction=16.
    B, C, H, W = 2, 32, 16, 16
    reduction = 16
    Cr = C // reduction  # 2

    key = jax.random.PRNGKey(0)
    kx, k1, k2, k3, k4 = jax.random.split(key, 5)

    x = jax.random.normal(kx, (B, C, H, W), dtype=jnp.float32)

    # Deterministic synthetic parameters (Linear weights stored as (in, out)).
    w1 = jax.random.normal(k1, (C, Cr), dtype=jnp.float32) * 0.1
    b1 = jax.random.normal(k2, (Cr,), dtype=jnp.float32) * 0.1
    w2 = jax.random.normal(k3, (Cr, C), dtype=jnp.float32) * 0.1
    b2 = jax.random.normal(k4, (C,), dtype=jnp.float32) * 0.1

    out = se_block(x, w1, b1, w2, b2)
    out = jax.block_until_ready(out)

    ref = se_block_ref(x, w1, b1, w2, b2)
    assert out.shape == (B, C, H, W)
    assert jnp.allclose(out, ref, atol=1e-5, rtol=1e-4), "mismatch vs reference"

    print("KERNEL_OK")
</pallas_src>

<mosaic_0001>
module attributes {stable_mosaic.version = 11 : i64} {
  func.func @se_block_kernel(%arg0: i32, %arg1: memref<1x32x256xf32, #tpu.memory_space<vmem>>, %arg2: memref<32x2xf32, #tpu.memory_space<vmem>>, %arg3: memref<1x2xf32, #tpu.memory_space<vmem>>, %arg4: memref<2x32xf32, #tpu.memory_space<vmem>>, %arg5: memref<1x32xf32, #tpu.memory_space<vmem>>, %arg6: memref<1x32x256xf32, #tpu.memory_space<vmem>>) attributes {dimension_semantics = [#tpu.dimension_semantics<parallel>], iteration_bounds = array<i64: 2>, scalar_prefetch = 0 : i64, scratch_operands = 0 : i64, tpu.core_type = #tpu.core_type<tc>, window_params = [{transform_indices = @transform_0, window_bounds = array<i64: 1, 32, 256>}, {pipeline_mode = #tpu.pipeline_mode<synchronous>, transform_indices = @transform_1, window_bounds = array<i64: 32, 2>}, {pipeline_mode = #tpu.pipeline_mode<synchronous>, transform_indices = @transform_2, window_bounds = array<i64: 1, 2>}, {pipeline_mode = #tpu.pipeline_mode<synchronous>, transform_indices = @transform_3, window_bounds = array<i64: 2, 32>}, {pipeline_mode = #tpu.pipeline_mode<synchronous>, transform_indices = @transform_4, window_bounds = array<i64: 1, 32>}, {transform_indices = @transform_5, window_bounds = array<i64: 1, 32, 256>}]} {
    %c0 = arith.constant 0 : index
    %c0_0 = arith.constant 0 : index
    %c0_1 = arith.constant 0 : index
    %0 = vector.load %arg1[%c0, %c0_0, %c0_1] : memref<1x32x256xf32, #tpu.memory_space<vmem>>, vector<1x32x256xf32>
    %cst = arith.constant 1.000000e+00 : f32
    %1 = vector.broadcast %cst : f32 to vector<1x256x1xf32>
    "tpu.trace_start"() <{level = 10 : i32, message = "bch,bhk->bck"}> : () -> ()
    %cst_2 = arith.constant dense<0.000000e+00> : vector<1x32x1xf32>
    %2 = tpu.matmul %0, %1, %cst_2 {dimension_numbers = #tpu.dot_dimension_numbers<[2], [1], [1], [2], [0, 0, 0, 1, 1, 2], [0], [0]>, precision = #tpu.contract_precision<fp32>} : vector<1x32x256xf32>, vector<1x256x1xf32>, vector<1x32x1xf32> -> vector<1x32x1xf32>
    "tpu.trace_stop"() : () -> ()
    %3 = vector.shape_cast %2 : vector<1x32x1xf32> to vector<1x32xf32>
    %cst_3 = arith.constant 3.906250e-03 : f32
    %4 = vector.broadcast %cst_3 : f32 to vector<1x32xf32>
    %5 = arith.mulf %3, %4 : vector<1x32xf32>
    %c0_4 = arith.constant 0 : index
    %c0_5 = arith.constant 0 : index
    %6 = vector.load %arg2[%c0_4, %c0_5] : memref<32x2xf32, #tpu.memory_space<vmem>>, vector<32x2xf32>
    %cst_6 = arith.constant dense<0.000000e+00> : vector<1x2xf32>
    %7 = tpu.matmul %5, %6, %cst_6 {dimension_numbers = #tpu.dot_dimension_numbers<[1], [0], [0], [1], [0, 0, 1, 1], [], []>} : vector<1x32xf32>, vector<32x2xf32>, vector<1x2xf32> -> vector<1x2xf32>
    %c0_7 = arith.constant 0 : index
    %c0_8 = arith.constant 0 : index
    %8 = vector.load %arg3[%c0_7, %c0_8] : memref<1x2xf32, #tpu.memory_space<vmem>>, vector<1x2xf32>
    %9 = arith.addf %7, %8 : vector<1x2xf32>
    %cst_9 = arith.constant 0.000000e+00 : f32
    %10 = vector.broadcast %cst_9 : f32 to vector<1x2xf32>
    %11 = arith.maximumf %9, %10 : vector<1x2xf32>
    %c0_10 = arith.constant 0 : index
    %c0_11 = arith.constant 0 : index
    %12 = vector.load %arg4[%c0_10, %c0_11] : memref<2x32xf32, #tpu.memory_space<vmem>>, vector<2x32xf32>
    %cst_12 = arith.constant dense<0.000000e+00> : vector<1x32xf32>
    %13 = tpu.matmul %11, %12, %cst_12 {dimension_numbers = #tpu.dot_dimension_numbers<[1], [0], [0], [1], [0, 0, 1, 1], [], []>} : vector<1x2xf32>, vector<2x32xf32>, vector<1x32xf32> -> vector<1x32xf32>
    %c0_13 = arith.constant 0 : index
    %c0_14 = arith.constant 0 : index
    %14 = vector.load %arg5[%c0_13, %c0_14] : memref<1x32xf32, #tpu.memory_space<vmem>>, vector<1x32xf32>
    %15 = arith.addf %13, %14 : vector<1x32xf32>
    %16 = arith.negf %15 : vector<1x32xf32>
    %17 = math.exp %16 : vector<1x32xf32>
    %cst_15 = arith.constant 1.000000e+00 : f32
    %18 = vector.broadcast %cst_15 : f32 to vector<1x32xf32>
    %19 = arith.addf %18, %17 : vector<1x32xf32>
    %20 = arith.divf %18, %19 : vector<1x32xf32>
    %21 = vector.shape_cast %20 : vector<1x32xf32> to vector<1x32x1xf32>
    %22 = vector.broadcast %21 : vector<1x32x1xf32> to vector<1x32x256xf32>
    %23 = arith.mulf %0, %22 : vector<1x32x256xf32>
    %c0_16 = arith.constant 0 : index
    %c0_17 = arith.constant 0 : index
    %c0_18 = arith.constant 0 : index
    %24 = vector.load %arg6[%c0_16, %c0_17, %c0_18] : memref<1x32x256xf32, #tpu.memory_space<vmem>>, vector<1x32x256xf32>
    tpu.vector_store %arg6[%c0_16, %c0_17, %c0_18], %23 {strides = array<i32>} : memref<1x32x256xf32, #tpu.memory_space<vmem>>, vector<1x32x256xf32>,
    return
  }
  func.func @transform_0(%arg0: i32) -> (i32, i32, i32) {
    %c0_i32 = arith.constant 0 : i32
    %c0_i32_0 = arith.constant 0 : i32
    %c0_i32_1 = arith.constant 0 : i32
    return %arg0, %c0_i32, %c0_i32_0 : i32, i32, i32
  }
  func.func @transform_1(%arg0: i32) -> (i32, i32) {
    %c0_i32 = arith.constant 0 : i32
    %c0_i32_0 = arith.constant 0 : i32
    %c0_i32_1 = arith.constant 0 : i32
    return %c0_i32, %c0_i32_0 : i32, i32
  }
  func.func @transform_2(%arg0: i32) -> (i32, i32) {
    %c0_i32 = arith.constant 0 : i32
    %c0_i32_0 = arith.constant 0 : i32
    %c0_i32_1 = arith.constant 0 : i32
    return %c0_i32, %c0_i32_0 : i32, i32
  }
  func.func @transform_3(%arg0: i32) -> (i32, i32) {
    %c0_i32 = arith.constant 0 : i32
    %c0_i32_0 = arith.constant 0 : i32
    %c0_i32_1 = arith.constant 0 : i32
    return %c0_i32, %c0_i32_0 : i32, i32
  }
  func.func @transform_4(%arg0: i32) -> (i32, i32) {
    %c0_i32 = arith.constant 0 : i32
    %c0_i32_0 = arith.constant 0 : i32
    %c0_i32_1 = arith.constant 0 : i32
    return %c0_i32, %c0_i32_0 : i32, i32
  }
  func.func @transform_5(%arg0: i32) -> (i32, i32, i32) {
    %c0_i32 = arith.constant 0 : i32
    %c0_i32_0 = arith.constant 0 : i32
    %c0_i32_1 = arith.constant 0 : i32
    return %arg0, %c0_i32, %c0_i32_0 : i32, i32, i32
  }
}

</mosaic_0001>

<llo_original>
// kernel: se_block.1
$region0: #{se_block.1}
  #allocation0 [shape = 'u32[]', space=smem, size = 0x4, offset = 0x4, fixed_abs, tag = 'smem constant byte address 0x4 - core index']
  #allocation1 [shape = 'u32[144,128]{1,0:T(1,128)}', space=vmem, size = 0x12000, scoped, tag = 'internal scratch']
  %s0 = inlined_call_operand.vmem [shape: f32[2,32,256], index: 0, kind: input, shape index: {}]
  %s1 = inlined_call_operand.vmem [shape: f32[32,2], index: 1, kind: input, shape index: {}]
  %s2 = inlined_call_operand.vmem [shape: f32[1,2], index: 2, kind: input, shape index: {}]
  %s3 = inlined_call_operand.vmem [shape: f32[2,32], index: 3, kind: input, shape index: {}]
  %s4 = inlined_call_operand.vmem [shape: f32[1,32], index: 4, kind: input, shape index: {}]
  %s5 = inlined_call_operand.vmem [shape: f32[2,32,256], index: 5, kind: output, shape index: {}]
  %s6 = sld [smem:[#allocation0]]
  $region53: #{se_block.1} parent=0
    _
  %s8 = ssub.s32 1, %s6
  %s9 = scalar_select 0, %s8, %s6
  loop: start=0, step=1, limit=4
  $region2: #{se_block.1} parent=0 // loop_pre_header
    _
  $region3: #{se_block.1} parent=0 // loop_header
    %s11 = sphi 0, %s15
    %p12 = scmp.ge.s32.totalorder %s11, 4
    %s21 = sphi 0, %s23
    %s24 = sphi 0, %s21
    %s25 = sphi 0, %s24
    %s41 = sphi 0, %s25
    %s45 = sphi 0, %s45
    %s47 = sphi 0, %s45
    %s48 = sphi 0, %s47
    %s62 = sphi 0, %s48
    %s66 = sphi 0, %s66
    %s68 = sphi 0, %s66
    %s69 = sphi 0, %s68
    %s83 = sphi 0, %s69
    %s87 = sphi 0, %s87
    %s89 = sphi 0, %s87
    %s90 = sphi 0, %s89
    %s104 = sphi 0, %s90
    %s108 = sphi 0, %s108
    %s110 = sphi 0, %s108
    %s111 = sphi 0, %s110
    %s125 = sphi 0, %s111
    %s131 = sphi 0, %s133
    %s134 = sphi 0, %s131
    %s135 = sphi 0, %s134
    %s151 = sphi 0, %s135
  $region4: #{se_block.1} parent=0 // loop_header_branch
    %14 = sbr.rel (%p12) target = $region8
  $region5: #{se_block.1} parent=0 // loop_body
    %s16 = ssub.s32 %s11, 1
    %s17 = ssub.s32 %s11, 2
    %s18 = sadd.s32 %s11, 1
    %s19 = ssub.s32 %s11, %s18
    %p20 = scmp.eq.s32.totalorder %s19, 0
    %s22 = sadd.s32 %s21, 1
    %s23 = scalar_select %p20, %s21, %s22
    %p26 = pneg %p20
    %p27 = scmp.eq.s32.totalorder %s11, 1
    %p28 = por %p26, %p27
    %p29 = scmp.ne.s32.totalorder %s21, %s24
    %p30 = scmp.eq.s32.totalorder %s11, 0
    %p31 = por %p29, %p30
    %p32 = scmp.ne.s32.totalorder %s21, %s24
    %p33 = scmp.eq.s32.totalorder %s16, 1
    %p34 = por %p32, %p33
    %p35 = scmp.ne.s32.totalorder %s24, %s25
    %p36 = scmp.eq.s32.totalorder %s16, 0
    %p37 = por %p35, %p36
    %p38 = scmp.ne.s32.totalorder %s24, %s25
    %p39 = scmp.eq.s32.totalorder %s17, 1
    %p40 = por %p38, %p39
    %p42 = scmp.ne.s32.totalorder %s25, %s41
    %p43 = scmp.eq.s32.totalorder %s17, 0
    %p44 = por %p42, %p43
    %s46 = sadd.s32 %s45, 1
    %p49 = scmp.eq.s32.totalorder %s11, 1
    %p50 = scmp.ne.s32.totalorder %s45, %s47
    %p51 = scmp.eq.s32.totalorder %s11, 0
    %p52 = por %p50, %p51
    %p53 = scmp.ne.s32.totalorder %s45, %s47
    %p54 = scmp.eq.s32.totalorder %s16, 1
    %p55 = por %p53, %p54
    %p56 = scmp.ne.s32.totalorder %s47, %s48
    %p57 = scmp.eq.s32.totalorder %s16, 0
    %p58 = por %p56, %p57
    %p59 = scmp.ne.s32.totalorder %s47, %s48
    %p60 = scmp.eq.s32.totalorder %s17, 1
    %p61 = por %p59, %p60
    %p63 = scmp.ne.s32.totalorder %s48, %s62
    %p64 = scmp.eq.s32.totalorder %s17, 0
    %p65 = por %p63, %p64
    %s67 = sadd.s32 %s66, 1
    %p70 = scmp.eq.s32.totalorder %s11, 1
    %p71 = scmp.ne.s32.totalorder %s66, %s68
    %p72 = scmp.eq.s32.totalorder %s11, 0
    %p73 = por %p71, %p72
    %p74 = scmp.ne.s32.totalorder %s66, %s68
    %p75 = scmp.eq.s32.totalorder %s16, 1
    %p76 = por %p74, %p75
    %p77 = scmp.ne.s32.totalorder %s68, %s69
    %p78 = scmp.eq.s32.totalorder %s16, 0
    %p79 = por %p77, %p78
    %p80 = scmp.ne.s32.totalorder %s68, %s69
    %p81 = scmp.eq.s32.totalorder %s17, 1
    %p82 = por %p80, %p81
    %p84 = scmp.ne.s32.totalorder %s69, %s83
    %p85 = scmp.eq.s32.totalorder %s17, 0
    %p86 = por %p84, %p85
    %s88 = sadd.s32 %s87, 1
    %p91 = scmp.eq.s32.totalorder %s11, 1
    %p92 = scmp.ne.s32.totalorder %s87, %s89
    %p93 = scmp.eq.s32.totalorder %s11, 0
    %p94 = por %p92, %p93
    %p95 = scmp.ne.s32.totalorder %s87, %s89
    %p96 = scmp.eq.s32.totalorder %s16, 1
    %p97 = por %p95, %p96
    %p98 = scmp.ne.s32.totalorder %s89, %s90
    %p99 = scmp.eq.s32.totalorder %s16, 0
    %p100 = por %p98, %p99
    %p101 = scmp.ne.s32.totalorder %s89, %s90
    %p102 = scmp.eq.s32.totalorder %s17, 1
    %p103 = por %p101, %p102
    %p105 = scmp.ne.s32.totalorder %s90, %s104
    %p106 = scmp.eq.s32.totalorder %s17, 0
    %p107 = por %p105, %p106
    %s109 = sadd.s32 %s108, 1
    %p112 = scmp.eq.s32.totalorder %s11, 1
    %p113 = scmp.ne.s32.totalorder %s108, %s110
    %p114 = scmp.eq.s32.totalorder %s11, 0
    %p115 = por %p113, %p114
    %p116 = scmp.ne.s32.totalorder %s108, %s110
    %p117 = scmp.eq.s32.totalorder %s16, 1
    %p118 = por %p116, %p117
    %p119 = scmp.ne.s32.totalorder %s110, %s111
    %p120 = scmp.eq.s32.totalorder %s16, 0
    %p121 = por %p119, %p120
    %p122 = scmp.ne.s32.totalorder %s110, %s111
    %p123 = scmp.eq.s32.totalorder %s17, 1
    %p124 = por %p122, %p123
    %p126 = scmp.ne.s32.totalorder %s111, %s125
    %p127 = scmp.eq.s32.totalorder %s17, 0
    %p128 = por %p126, %p127
    %s129 = ssub.s32 %s11, %s18
    %p130 = scmp.eq.s32.totalorder %s129, 0
    %s132 = sadd.s32 %s131, 1
    %s133 = scalar_select %p130, %s131, %s132
    %p136 = pneg %p130
    %p137 = scmp.eq.s32.totalorder %s11, 1
    %p138 = por %p136, %p137
    %p139 = scmp.ne.s32.totalorder %s131, %s134
    %p140 = scmp.eq.s32.totalorder %s11, 0
    %p141 = por %p139, %p140
    %p142 = scmp.ne.s32.totalorder %s131, %s134
    %p143 = scmp.eq.s32.totalorder %s16, 1
    %p144 = por %p142, %p143
    %p145 = scmp.ne.s32.totalorder %s134, %s135
    %p146 = scmp.eq.s32.totalorder %s16, 0
    %p147 = por %p145, %p146
    %p148 = scmp.ne.s32.totalorder %s134, %s135
    %p149 = scmp.eq.s32.totalorder %s17, 1
    %p150 = por %p148, %p149
    %p152 = scmp.ne.s32.totalorder %s135, %s151
    %p153 = scmp.eq.s32.totalorder %s17, 0
    %p154 = por %p152, %p153
    %p155 = scmp.le.s32.totalorder 1, %s11
    %p156 = scmp.lt.s32.totalorder %s11, 3
    %p157 = pnand %p155, %p156
    %p158 = pneg %p157
    // Predicated region
    $region9: #{se_block.1} parent=5 // pred_check
      _
    $region10: #{se_block.1} parent=5 // pred_check_branch
      %160 = sbr.rel (%p157) target = $region12
    $region11: #{se_block.1} parent=5 // pred_region
      %s161 = ssub.s32 %s11, 1
      // Predicated region
      $region13: #{se_block.1} parent=11 // pred_check
        %p162 = pneg %p58
      $region14: #{se_block.1} parent=11 // pred_check_branch
        %164 = sbr.rel (%p162) target = $region16
      $region15: #{se_block.1} parent=11 // pred_region
        _
      $region16: #{se_block.1} parent=11 // pred_fallthru
        _
      // Predicated region
      $region17: #{se_block.1} parent=11 // pred_check
        %p165 = pneg %p79
      $region18: #{se_block.1} parent=11 // pred_check_branch
        %167 = sbr.rel (%p165) target = $region20
      $region19: #{se_block.1} parent=11 // pred_region
        _
      $region20: #{se_block.1} parent=11 // pred_fallthru
        _
      // Predicated region
      $region21: #{se_block.1} parent=11 // pred_check
        %p168 = pneg %p100
      $region22: #{se_block.1} parent=11 // pred_check_branch
        %170 = sbr.rel (%p168) target = $region24
      $region23: #{se_block.1} parent=11 // pred_region
        _
      $region24: #{se_block.1} parent=11 // pred_fallthru
        _
      // Predicated region
      $region25: #{se_block.1} parent=11 // pred_check
        %p171 = pneg %p121
      $region26: #{se_block.1} parent=11 // pred_check_branch
        %173 = sbr.rel (%p171) target = $region28
      $region27: #{se_block.1} parent=11 // pred_region
        _
      $region28: #{se_block.1} parent=11 // pred_fallthru
        _
    $region12: #{se_block.1} parent=5 // pred_fallthru
      _
    %p174 = scmp.lt.s32.totalorder %s11, 2
    // Predicated region
    $region29: #{se_block.1} parent=5 // pred_check
      %p175 = pneg %p174
    $region30: #{se_block.1} parent=5 // pred_check_branch
      %177 = sbr.rel (%p175) target = $region32
    $region31: #{se_block.1} parent=5 // pred_region
      // Predicated region
      $region33: #{se_block.1} parent=31 // pred_check
        %p178 = pneg %p31
      $region34: #{se_block.1} parent=31 // pred_check_branch
        %180 = sbr.rel (%p178) target = $region36
      $region35: #{se_block.1} parent=31 // pred_region
        %p181 = scmp.lt.s32.totalorder %s11, 1
        %s182 = scalar_select %p181, %s11, 1
        %s183 = smul.addr %s182, 8
        %s184 = smul.addr %s183, 8
        %s185 = scalar_lea.vmem %s0, %s184
      $region36: #{se_block.1} parent=31 // pred_fallthru
        _
    $region32: #{se_block.1} parent=5 // pred_fallthru
      _
    %p186 = scmp.le.s32.totalorder 1, %s11
    %p187 = scmp.lt.s32.totalorder %s11, 3
    %p188 = pnand %p186, %p187
    %p189 = pneg %p188
    // Predicated region
    $region37: #{se_block.1} parent=5 // pred_check
      _
    $region38: #{se_block.1} parent=5 // pred_check_branch
      %191 = sbr.rel (%p188) target = $region40
    $region39: #{se_block.1} parent=5 // pred_region
      %s192 = ssub.s32 %s11, 1
      %p193 = scmp.lt.s32.totalorder %s16, 1
      %s194 = scalar_select %p193, %s16, 1
      %s195 = smul.addr %s194, 8
      %s196 = smul.addr %s195, 8
      %s197 = scalar_lea.vmem %s0, %s196
      %p198 = pneg %p37
      %p199 = pneg %p34
      %p200 = pneg %p58
      %p201 = pneg %p55
      %p202 = pneg %p79
      %p203 = pneg %p76
      %p204 = pneg %p100
      %p205 = pneg %p97
      %p206 = pneg %p121
      %p207 = pneg %p118
      %p208 = pneg %p147
      %p209 = pneg %p144
      %p210 = scmp.lt.s32.totalorder %s16, 1
      %s211 = scalar_select %p210, %s16, 1
      %s212 = smul.addr %s211, 8
      %s213 = smul.addr %s212, 8
      %s214 = scalar_lea.vmem %s5, %s213
      %p215 = scmp.lt.s32.totalorder %s16, 1
      %s216 = scalar_select %p215, %s16, 1
      %s217 = smul.addr %s216, 8
      %s218 = smul.addr %s217, 8
      %s219 = scalar_lea.vmem %s0, %s218
      %p220 = scmp.lt.s32.totalorder %s16, 1
      %s221 = scalar_select %p220, %s16, 1
      %s222 = smul.addr %s221, 8
      %s223 = smul.addr %s222, 8
      %s224 = scalar_lea.vmem %s5, %s223
      %v225 = vld [vmem:[%s219] sm:$0xff]
      %v226 = vld [vmem:[%s219 + $0x8] sm:$0xff]
      %v227 = vld [vmem:[%s219 + $0x10] sm:$0xff]
      %v228 = vld [vmem:[%s219 + $0x18] sm:$0xff]
      %v229 = vld [vmem:[%s219 + $0x20] sm:$0xff]
      %v230 = vld [vmem:[%s219 + $0x28] sm:$0xff]
      %v231 = vld [vmem:[%s219 + $0x30] sm:$0xff]
      %v232 = vld [vmem:[%s219 + $0x38] sm:$0xff]
      %233 = vmatprep.subr.mxu0 0.0
      %234 = vmatpush1.msra.mxu0 1.0
      %235 = vmatprep.subr.mxu0 0.0
      %236 = vmatpush1.msra.mxu0 1.0
      %237 = vmatprep.subr.mxu0 0.0
      %238 = vmatpush1.msra.mxu0 1.0
      %239 = vmatprep.subr.mxu0 0.0
      %240 = vmatpush1.msra.mxu0 1.0
      %241 = vmatprep.subr.mxu0 0.0
      %242 = vmatpush1.msra.mxu0 1.0
      %243 = vmatprep.subr.mxu0 0.0
      %244 = vmatpush1.msra.mxu0 1.0
      %245 = vmatprep.subr.mxu0 0.0
      %246 = vmatpush1.msra.mxu0 1.0
      %247 = vmatprep.subr.mxu0 0.0
      %248 = vmatpush1.msra.mxu0 1.0
      %249 = vmatprep.subr.mxu0 0.0
      %250 = vmatpush1.msra.mxu0 1.0
      %251 = vmatprep.subr.mxu0 0.0
      %252 = vmatpush1.msra.mxu0 1.0
      %253 = vmatprep.subr.mxu0 0.0
      %254 = vmatpush1.msra.mxu0 1.0
      %255 = vmatprep.subr.mxu0 0.0
      %256 = vmatpush1.msra.mxu0 1.0
      %257 = vmatprep.subr.mxu0 0.0
      %258 = vmatpush1.msra.mxu0 1.0
      %259 = vmatprep.subr.mxu0 0.0
      %260 = vmatpush1.msra.mxu0 1.0
      %261 = vmatprep.subr.mxu0 0.0
      %262 = vmatpush1.msra.mxu0 1.0
      %263 = vmatprep.subr.mxu0 0.0
      %264 = vmatpush1.msra.mxu0 1.0
      %265 = vmatprep.subr.mxu0 0.0
      %266 = vmatpush1.msra.mxu0 1.0
      %267 = vmatprep.subr.mxu0 0.0
      %268 = vmatpush1.msra.mxu0 1.0
      %269 = vmatprep.subr.mxu0 0.0
      %270 = vmatpush1.msra.mxu0 1.0
      %271 = vmatprep.subr.mxu0 0.0
      %272 = vmatpush1.msra.mxu0 1.0
      %273 = vmatprep.subr.mxu0 0.0
      %274 = vmatpush1.msra.mxu0 1.0
      %275 = vmatprep.subr.mxu0 0.0
      %276 = vmatpush1.msra.mxu0 1.0
      %277 = vmatprep.subr.mxu0 0.0
      %278 = vmatpush1.msra.mxu0 1.0
      %279 = vmatprep.subr.mxu0 0.0
      %280 = vmatpush1.msra.mxu0 1.0
      %281 = vmatprep.subr.mxu0 0.0
      %282 = vmatpush1.msra.mxu0 1.0
      %283 = vmatprep.subr.mxu0 0.0
      %284 = vmatpush1.msra.mxu0 1.0
      %285 = vmatprep.subr.mxu0 0.0
      %286 = vmatpush1.msra.mxu0 1.0
      %287 = vmatprep.subr.mxu0 0.0
      %288 = vmatpush1.msra.mxu0 1.0
      %289 = vmatprep.subr.mxu0 0.0
      %290 = vmatpush1.msra.mxu0 1.0
      %291 = vmatprep.subr.mxu0 0.0
      %292 = vmatpush1.msra.mxu0 1.0
      %293 = vmatprep.subr.mxu0 0.0
      %294 = vmatpush1.msra.mxu0 1.0
      %295 = vmatprep.subr.mxu0 0.0
      %296 = vmatpush1.msra.mxu0 1.0
      %v297 = vand.u32 %v226, 4294901760
      %v298 = vsub.f32 %v226, %v297
      %v299 = vand.u32 %v298, 4294901760
      %v300 = vsub.f32 %v298, %v299
      %v301 = vand.u32 %v300, 4294901760
      %302 = vmatprep.mubr.f32.mxu0 %v301
      %v303 = vand.u32 %v225, 4294901760
      %v304 = vsub.f32 %v225, %v303
      %v305 = vand.u32 %v304, 4294901760
      %v306 = vsub.f32 %v304, %v305
      %v307 = vand.u32 %v306, 4294901760
      %308 = vmatmul.mubr.f32.gmra.mrb[0].mxu0 %v307
      %v309 = vpop.f32.mrb[0].mxu0
      %v310 = vadd.f32 0.0, %v309
      %v311 = vpop.f32.mrb[0].mxu0
      %v312 = vand.u32 %v228, 4294901760
      %v313 = vsub.f32 %v228, %v312
      %v314 = vand.u32 %v313, 4294901760
      %v315 = vsub.f32 %v313, %v314
      %v316 = vand.u32 %v315, 4294901760
      %317 = vmatprep.mubr.f32.mxu0 %v316
      %v318 = vand.u32 %v227, 4294901760
      %v319 = vsub.f32 %v227, %v318
      %v320 = vand.u32 %v319, 4294901760
      %v321 = vsub.f32 %v319, %v320
      %v322 = vand.u32 %v321, 4294901760
      %323 = vmatmul.mubr.f32.gmra.mrb[0].mxu0 %v322
      %v324 = vpop.f32.mrb[0].mxu0
      %v325 = vadd.f32 0.0, %v324
      %v326 = vpop.f32.mrb[0].mxu0
      %v327 = vand.u32 %v230, 4294901760
      %v328 = vsub.f32 %v230, %v327
      %v329 = vand.u32 %v328, 4294901760
      %v330 = vsub.f32 %v328, %v329
      %v331 = vand.u32 %v330, 4294901760
      %332 = vmatprep.mubr.f32.mxu0 %v331
      %v333 = vand.u32 %v229, 4294901760
      %v334 = vsub.f32 %v229, %v333
      %v335 = vand.u32 %v334, 4294901760
      %v336 = vsub.f32 %v334, %v335
      %v337 = vand.u32 %v336, 4294901760
      %338 = vmatmul.mubr.f32.gmra.mrb[0].mxu0 %v337
      %v339 = vpop.f32.mrb[0].mxu0
      %v340 = vadd.f32 0.0, %v339
      %v341 = vpop.f32.mrb[0].mxu0
      %v342 = vand.u32 %v232, 4294901760
      %v343 = vsub.f32 %v232, %v342
      %v344 = vand.u32 %v343, 4294901760
      %v345 = vsub.f32 %v343, %v344
      %v346 = vand.u32 %v345, 4294901760
      %347 = vmatprep.mubr.f32.mxu0 %v346
      %v348 = vand.u32 %v231, 4294901760
      %v349 = vsub.f32 %v231, %v348
      %v350 = vand.u32 %v349, 4294901760
      %v351 = vsub.f32 %v349, %v350
      %v352 = vand.u32 %v351, 4294901760
      %353 = vmatmul.mubr.f32.gmra.mrb[0].mxu0 %v352
      %v354 = vpop.f32.mrb[0].mxu0
      %v355 = vadd.f32 0.0, %v354
      %v356 = vpop.f32.mrb[0].mxu0
      %357 = vdwg.mxu0
      %358 = vmatprep.subr.mxu0 0.0
      %359 = vmatpush1.msra.mxu0 0.0
      %360 = vmatprep.subr.mxu0 0.0
      %361 = vmatpush1.msra.mxu0 0.0
      %362 = vmatprep.subr.mxu0 0.0
      %363 = vmatpush1.msra.mxu0 0.0
      %364 = vmatprep.subr.mxu0 0.0
      %365 = vmatpush1.msra.mxu0 0.0
      %366 = vmatprep.subr.mxu0 0.0
      %367 = vmatpush1.msra.mxu0 0.0
      %368 = vmatprep.subr.mxu0 0.0
      %369 = vmatpush1.msra.mxu0 0.0
      %370 = vmatprep.subr.mxu0 0.0
      %371 = vmatpush1.msra.mxu0 0.0
      %372 = vmatprep.subr.mxu0 0.0
      %373 = vmatpush1.msra.mxu0 0.0
      %374 = vmatprep.subr.mxu0 0.0
      %375 = vmatpush1.msra.mxu0 0.0
      %376 = vmatprep.subr.mxu0 0.0
      %377 = vmatpush1.msra.mxu0 0.0
      %378 = vmatprep.subr.mxu0 0.0
      %379 = vmatpush1.msra.mxu0 0.0
      %380 = vmatprep.subr.mxu0 0.0
      %381 = vmatpush1.msra.mxu0 0.0
      %382 = vmatprep.subr.mxu0 0.0
      %383 = vmatpush1.msra.mxu0 0.0
      %384 = vmatprep.subr.mxu0 0.0
      %385 = vmatpush1.msra.mxu0 0.0
      %386 = vmatprep.subr.mxu0 0.0
      %387 = vmatpush1.msra.mxu0 0.0
      %388 = vmatprep.subr.mxu0 0.0
      %389 = vmatpush1.msra.mxu0 0.0
      %390 = vmatprep.subr.mxu0 0.0
      %391 = vmatpush1.msra.mxu0 0.0
      %392 = vmatprep.subr.mxu0 0.0
      %393 = vmatpush1.msra.mxu0 0.0
      %394 = vmatprep.subr.mxu0 0.0
      %395 = vmatpush1.msra.mxu0 0.0
      %396 = vmatprep.subr.mxu0 0.0
      %397 = vmatpush1.msra.mxu0 0.0
      %398 = vmatprep.subr.mxu0 0.0
      %399 = vmatpush1.msra.mxu0 0.0
      %400 = vmatprep.subr.mxu0 0.0
      %401 = vmatpush1.msra.mxu0 0.0
      %402 = vmatprep.subr.mxu0 0.0
      %403 = vmatpush1.msra.mxu0 0.0
      %404 = vmatprep.subr.mxu0 0.0
      %405 = vmatpush1.msra.mxu0 0.0
      %406 = vmatprep.subr.mxu0 0.0
      %407 = vmatpush1.msra.mxu0 0.0
      %408 = vmatprep.subr.mxu0 0.0
      %409 = vmatpush1.msra.mxu0 0.0
      %410 = vmatprep.subr.mxu0 0.0
      %411 = vmatpush1.msra.mxu0 0.0
      %412 = vmatprep.subr.mxu0 0.0
      %413 = vmatpush1.msra.mxu0 0.0
      %414 = vmatprep.subr.mxu0 0.0
      %415 = vmatpush1.msra.mxu0 0.0
      %416 = vmatprep.subr.mxu0 0.0
      %417 = vmatpush1.msra.mxu0 0.0
      %418 = vmatprep.subr.mxu0 0.0
      %419 = vmatpush1.msra.mxu0 0.0
      %420 = vmatprep.subr.mxu0 0.0
      %421 = vmatpush1.msra.mxu0 0.0
      %v422 = vand.u32 %v226, 4294901760
      %423 = vmatprep.mubr.f32.mxu0 %v422
      %v424 = vand.u32 %v225, 4294901760
      %425 = vmatmul.mubr.f32.gmra.mrb[0].mxu0 %v424
      %v426 = vpop.f32.mrb[0].mxu0
      %v427 = vadd.f32 %v310, %v426
      %v428 = vpop.f32.mrb[0].mxu0
      %v429 = vand.u32 %v228, 4294901760
      %430 = vmatprep.mubr.f32.mxu0 %v429
      %v431 = vand.u32 %v227, 4294901760
      %432 = vmatmul.mubr.f32.gmra.mrb[0].mxu0 %v431
      %v433 = vpop.f32.mrb[0].mxu0
      %v434 = vadd.f32 %v325, %v433
      %v435 = vpop.f32.mrb[0].mxu0
      %v436 = vand.u32 %v230, 4294901760
      %437 = vmatprep.mubr.f32.mxu0 %v436
      %v438 = vand.u32 %v229, 4294901760
      %439 = vmatmul.mubr.f32.gmra.mrb[0].mxu0 %v438
      %v440 = vpop.f32.mrb[0].mxu0
      %v441 = vadd.f32 %v340, %v440
      %v442 = vpop.f32.mrb[0].mxu0
      %v443 = vand.u32 %v232, 4294901760
      %444 = vmatprep.mubr.f32.mxu0 %v443
      %v445 = vand.u32 %v231, 4294901760
      %446 = vmatmul.mubr.f32.gmra.mrb[0].mxu0 %v445
      %v447 = vpop.f32.mrb[0].mxu0
      %v448 = vadd.f32 %v355, %v447
      %v449 = vpop.f32.mrb[0].mxu0
      %450 = vdwg.mxu0
      %451 = vmatprep.subr.mxu0 0.0
      %452 = vmatpush1.msra.mxu0 0.0
      %453 = vmatprep.subr.mxu0 0.0
      %454 = vmatpush1.msra.mxu0 0.0
      %455 = vmatprep.subr.mxu0 0.0
      %456 = vmatpush1.msra.mxu0 0.0
      %457 = vmatprep.subr.mxu0 0.0
      %458 = vmatpush1.msra.mxu0 0.0
      %459 = vmatprep.subr.mxu0 0.0
      %460 = vmatpush1.msra.mxu0 0.0
      %461 = vmatprep.subr.mxu0 0.0
      %462 = vmatpush1.msra.mxu0 0.0
      %463 = vmatprep.subr.mxu0 0.0
      %464 = vmatpush1.msra.mxu0 0.0
      %465 = vmatprep.subr.mxu0 0.0
      %466 = vmatpush1.msra.mxu0 0.0
      %467 = vmatprep.subr.mxu0 0.0
      %468 = vmatpush1.msra.mxu0 0.0
      %469 = vmatprep.subr.mxu0 0.0
      %470 = vmatpush1.msra.mxu0 0.0
      %471 = vmatprep.subr.mxu0 0.0
      %472 = vmatpush1.msra.mxu0 0.0
      %473 = vmatprep.subr.mxu0 0.0
      %474 = vmatpush1.msra.mxu0 0.0
      %475 = vmatprep.subr.mxu0 0.0
      %476 = vmatpush1.msra.mxu0 0.0
      %477 = vmatprep.subr.mxu0 0.0
      %478 = vmatpush1.msra.mxu0 0.0
      %479 = vmatprep.subr.mxu0 0.0
      %480 = vmatpush1.msra.mxu0 0.0
      %481 = vmatprep.subr.mxu0 0.0
      %482 = vmatpush1.msra.mxu0 0.0
      %483 = vmatprep.subr.mxu0 0.0
      %484 = vmatpush1.msra.mxu0 0.0
      %485 = vmatprep.subr.mxu0 0.0
      %486 = vmatpush1.msra.mxu0 0.0
      %487 = vmatprep.subr.mxu0 0.0
      %488 = vmatpush1.msra.mxu0 0.0
      %489 = vmatprep.subr.mxu0 0.0
      %490 = vmatpush1.msra.mxu0 0.0
      %491 = vmatprep.subr.mxu0 0.0
      %492 = vmatpush1.msra.mxu0 0.0
      %493 = vmatprep.subr.mxu0 0.0
      %494 = vmatpush1.msra.mxu0 0.0
      %495 = vmatprep.subr.mxu0 0.0
      %496 = vmatpush1.msra.mxu0 0.0
      %497 = vmatprep.subr.mxu0 0.0
      %498 = vmatpush1.msra.mxu0 0.0
      %499 = vmatprep.subr.mxu0 0.0
      %500 = vmatpush1.msra.mxu0 0.0
      %501 = vmatprep.subr.mxu0 0.0
      %502 = vmatpush1.msra.mxu0 0.0
      %503 = vmatprep.subr.mxu0 0.0
      %504 = vmatpush1.msra.mxu0 0.0
      %505 = vmatprep.subr.mxu0 0.0
      %506 = vmatpush1.msra.mxu0 0.0
      %507 = vmatprep.subr.mxu0 0.0
      %508 = vmatpush1.msra.mxu0 0.0
      %509 = vmatprep.subr.mxu0 0.0
      %510 = vmatpush1.msra.mxu0 0.0
      %511 = vmatprep.subr.mxu0 0.0
      %512 = vmatpush1.msra.mxu0 0.0
      %513 = vmatprep.subr.mxu0 0.0
      %514 = vmatpush1.msra.mxu0 0.0
      %v515 = vand.u32 %v226, 4294901760
      %v516 = vsub.f32 %v226, %v515
      %517 = vmatprep.mubr.f32.mxu0 %v516
      %v518 = vand.u32 %v225, 4294901760
      %v519 = vsub.f32 %v225, %v518
      %520 = vmatmul.mubr.f32.gmra.mrb[0].mxu0 %v519
      %v521 = vpop.f32.mrb[0].mxu0
      %v522 = vadd.f32 %v427, %v521
      %v523 = vpop.f32.mrb[0].mxu0
      %v524 = vand.u32 %v228, 4294901760
      %v525 = vsub.f32 %v228, %v524
      %526 = vmatprep.mubr.f32.mxu0 %v525
      %v527 = vand.u32 %v227, 4294901760
      %v528 = vsub.f32 %v227, %v527
      %529 = vmatmul.mubr.f32.gmra.mrb[0].mxu0 %v528
      %v530 = vpop.f32.mrb[0].mxu0
      %v531 = vadd.f32 %v434, %v530
      %v532 = vpop.f32.mrb[0].mxu0
      %v533 = vand.u32 %v230, 4294901760
      %v534 = vsub.f32 %v230, %v533
      %535 = vmatprep.mubr.f32.mxu0 %v534
      %v536 = vand.u32 %v229, 4294901760
      %v537 = vsub.f32 %v229, %v536
      %538 = vmatmul.mubr.f32.gmra.mrb[0].mxu0 %v537
      %v539 = vpop.f32.mrb[0].mxu0
      %v540 = vadd.f32 %v441, %v539
      %v541 = vpop.f32.mrb[0].mxu0
      %v542 = vand.u32 %v232, 4294901760
      %v543 = vsub.f32 %v232, %v542
      %544 = vmatprep.mubr.f32.mxu0 %v543
      %v545 = vand.u32 %v231, 4294901760
      %v546 = vsub.f32 %v231, %v545
      %547 = vmatmul.mubr.f32.gmra.mrb[0].mxu0 %v546
      %v548 = vpop.f32.mrb[0].mxu0
      %v549 = vadd.f32 %v448, %v548
      %v550 = vpop.f32.mrb[0].mxu0
      %551 = vdwg.mxu0
      %552 = vmatprep.subr.mxu0 0.0
      %553 = vmatpush1.msra.mxu0 1.0
      %554 = vmatprep.subr.mxu0 0.0
      %555 = vmatpush1.msra.mxu0 1.0
      %556 = vmatprep.subr.mxu0 0.0
      %557 = vmatpush1.msra.mxu0 1.0
      %558 = vmatprep.subr.mxu0 0.0
      %559 = vmatpush1.msra.mxu0 1.0
      %560 = vmatprep.subr.mxu0 0.0
      %561 = vmatpush1.msra.mxu0 1.0
      %562 = vmatprep.subr.mxu0 0.0
      %563 = vmatpush1.msra.mxu0 1.0
      %564 = vmatprep.subr.mxu0 0.0
      %565 = vmatpush1.msra.mxu0 1.0
      %566 = vmatprep.subr.mxu0 0.0
      %567 = vmatpush1.msra.mxu0 1.0
      %568 = vmatprep.subr.mxu0 0.0
      %569 = vmatpush1.msra.mxu0 1.0
      %570 = vmatprep.subr.mxu0 0.0
      %571 = vmatpush1.msra.mxu0 1.0
      %572 = vmatprep.subr.mxu0 0.0
      %573 = vmatpush1.msra.mxu0 1.0
      %574 = vmatprep.subr.mxu0 0.0
      %575 = vmatpush1.msra.mxu0 1.0
      %576 = vmatprep.subr.mxu0 0.0
      %577 = vmatpush1.msra.mxu0 1.0
      %578 = vmatprep.subr.mxu0 0.0
      %579 = vmatpush1.msra.mxu0 1.0
      %580 = vmatprep.subr.mxu0 0.0
      %581 = vmatpush1.msra.mxu0 1.0
      %582 = vmatprep.subr.mxu0 0.0
      %583 = vmatpush1.msra.mxu0 1.0
      %584 = vmatprep.subr.mxu0 0.0
      %585 = vmatpush1.msra.mxu0 1.0
      %586 = vmatprep.subr.mxu0 0.0
      %587 = vmatpush1.msra.mxu0 1.0
      %588 = vmatprep.subr.mxu0 0.0
      %589 = vmatpush1.msra.mxu0 1.0
      %590 = vmatprep.subr.mxu0 0.0
      %591 = vmatpush1.msra.mxu0 1.0
      %592 = vmatprep.subr.mxu0 0.0
      %593 = vmatpush1.msra.mxu0 1.0
      %594 = vmatprep.subr.mxu0 0.0
      %595 = vmatpush1.msra.mxu0 1.0
      %596 = vmatprep.subr.mxu0 0.0
      %597 = vmatpush1.msra.mxu0 1.0
      %598 = vmatprep.subr.mxu0 0.0
      %599 = vmatpush1.msra.mxu0 1.0
      %600 = vmatprep.subr.mxu0 0.0
      %601 = vmatpush1.msra.mxu0 1.0
      %602 = vmatprep.subr.mxu0 0.0
      %603 = vmatpush1.msra.mxu0 1.0
      %604 = vmatprep.subr.mxu0 0.0
      %605 = vmatpush1.msra.mxu0 1.0
      %606 = vmatprep.subr.mxu0 0.0
      %607 = vmatpush1.msra.mxu0 1.0
      %608 = vmatprep.subr.mxu0 0.0
      %609 = vmatpush1.msra.mxu0 1.0
      %610 = vmatprep.subr.mxu0 0.0
      %611 = vmatpush1.msra.mxu0 1.0
      %612 = vmatprep.subr.mxu0 0.0
      %613 = vmatpush1.msra.mxu0 1.0
      %614 = vmatprep.subr.mxu0 0.0
      %615 = vmatpush1.msra.mxu0 1.0
      %v616 = vand.u32 %v226, 4294901760
      %v617 = vsub.f32 %v226, %v616
      %v618 = vand.u32 %v617, 4294901760
      %619 = vmatprep.mubr.f32.mxu0 %v618
      %v620 = vand.u32 %v225, 4294901760
      %v621 = vsub.f32 %v225, %v620
      %v622 = vand.u32 %v621, 4294901760
      %623 = vmatmul.mubr.f32.gmra.mrb[0].mxu0 %v622
      %v624 = vpop.f32.mrb[0].mxu0
      %v625 = vadd.f32 %v522, %v624
      %v626 = vpop.f32.mrb[0].mxu0
      %v627 = vand.u32 %v228, 4294901760
      %v628 = vsub.f32 %v228, %v627
      %v629 = vand.u32 %v628, 4294901760
      %630 = vmatprep.mubr.f32.mxu0 %v629
      %v631 = vand.u32 %v227, 4294901760
      %v632 = vsub.f32 %v227, %v631
      %v633 = vand.u32 %v632, 4294901760
      %634 = vmatmul.mubr.f32.gmra.mrb[0].mxu0 %v633
      %v635 = vpop.f32.mrb[0].mxu0
      %v636 = vadd.f32 %v531, %v635
      %v637 = vpop.f32.mrb[0].mxu0
      %v638 = vand.u32 %v230, 4294901760
      %v639 = vsub.f32 %v230, %v638
      %v640 = vand.u32 %v639, 4294901760
      %641 = vmatprep.mubr.f32.mxu0 %v640
      %v642 = vand.u32 %v229, 4294901760
      %v643 = vsub.f32 %v229, %v642
      %v644 = vand.u32 %v643, 4294901760
      %645 = vmatmul.mubr.f32.gmra.mrb[0].mxu0 %v644
      %v646 = vpop.f32.mrb[0].mxu0
      %v647 = vadd.f32 %v540, %v646
      %v648 = vpop.f32.mrb[0].mxu0
      %v649 = vand.u32 %v232, 4294901760
      %v650 = vsub.f32 %v232, %v649
      %v651 = vand.u32 %v650, 4294901760
      %652 = vmatprep.mubr.f32.mxu0 %v651
      %v653 = vand.u32 %v231, 4294901760
      %v654 = vsub.f32 %v231, %v653
      %v655 = vand.u32 %v654, 4294901760
      %656 = vmatmul.mubr.f32.gmra.mrb[0].mxu0 %v655
      %v657 = vpop.f32.mrb[0].mxu0
      %v658 = vadd.f32 %v549, %v657
      %v659 = vpop.f32.mrb[0].mxu0
      %660 = vdwg.mxu0
      %661 = vmatprep.subr.mxu0 0.0
      %662 = vmatpush1.msra.mxu0 0.0
      %663 = vmatprep.subr.mxu0 0.0
      %664 = vmatpush1.msra.mxu0 0.0
      %665 = vmatprep.subr.mxu0 0.0
      %666 = vmatpush1.msra.mxu0 0.0
      %667 = vmatprep.subr.mxu0 0.0
      %668 = vmatpush1.msra.mxu0 0.0
      %669 = vmatprep.subr.mxu0 0.0
      %670 = vmatpush1.msra.mxu0 0.0
      %671 = vmatprep.subr.mxu0 0.0
      %672 = vmatpush1.msra.mxu0 0.0
      %673 = vmatprep.subr.mxu0 0.0
      %674 = vmatpush1.msra.mxu0 0.0
      %675 = vmatprep.subr.mxu0 0.0
      %676 = vmatpush1.msra.mxu0 0.0
      %677 = vmatprep.subr.mxu0 0.0
      %678 = vmatpush1.msra.mxu0 0.0
      %679 = vmatprep.subr.mxu0 0.0
      %680 = vmatpush1.msra.mxu0 0.0
      %681 = vmatprep.subr.mxu0 0.0
      %682 = vmatpush1.msra.mxu0 0.0
      %683 = vmatprep.subr.mxu0 0.0
      %684 = vmatpush1.msra.mxu0 0.0
      %685 = vmatprep.subr.mxu0 0.0
      %686 = vmatpush1.msra.mxu0 0.0
      %687 = vmatprep.subr.mxu0 0.0
      %688 = vmatpush1.msra.mxu0 0.0
      %689 = vmatprep.subr.mxu0 0.0
      %690 = vmatpush1.msra.mxu0 0.0
      %691 = vmatprep.subr.mxu0 0.0
      %692 = vmatpush1.msra.mxu0 0.0
      %693 = vmatprep.subr.mxu0 0.0
      %694 = vmatpush1.msra.mxu0 0.0
      %695 = vmatprep.subr.mxu0 0.0
      %696 = vmatpush1.msra.mxu0 0.0
      %697 = vmatprep.subr.mxu0 0.0
      %698 = vmatpush1.msra.mxu0 0.0
      %699 = vmatprep.subr.mxu0 0.0
      %700 = vmatpush1.msra.mxu0 0.0
      %701 = vmatprep.subr.mxu0 0.0
      %702 = vmatpush1.msra.mxu0 0.0
      %703 = vmatprep.subr.mxu0 0.0
      %704 = vmatpush1.msra.mxu0 0.0
      %705 = vmatprep.subr.mxu0 0.0
      %706 = vmatpush1.msra.mxu0 0.0
      %707 = vmatprep.subr.mxu0 0.0
      %708 = vmatpush1.msra.mxu0 0.0
      %709 = vmatprep.subr.mxu0 0.0
      %710 = vmatpush1.msra.mxu0 0.0
      %711 = vmatprep.subr.mxu0 0.0
      %712 = vmatpush1.msra.mxu0 0.0
      %713 = vmatprep.subr.mxu0 0.0
      %714 = vmatpush1.msra.mxu0 0.0
      %715 = vmatprep.subr.mxu0 0.0
      %716 = vmatpush1.msra.mxu0 0.0
      %717 = vmatprep.subr.mxu0 0.0
      %718 = vmatpush1.msra.mxu0 0.0
      %719 = vmatprep.subr.mxu0 0.0
      %720 = vmatpush1.msra.mxu0 0.0
      %721 = vmatprep.subr.mxu0 0.0
      %722 = vmatpush1.msra.mxu0 0.0
      %723 = vmatprep.subr.mxu0 0.0
      %724 = vmatpush1.msra.mxu0 0.0
      %v725 = vand.u32 %v226, 4294901760
      %726 = vmatprep.mubr.f32.mxu0 %v725
      %v727 = vand.u32 %v225, 4294901760
      %728 = vmatmul.mubr.f32.gmra.mrb[0].mxu0 %v727
      %v729 = vpop.f32.mrb[0].mxu0
      %v730 = vadd.f32 %v625, %v729
      %v731 = vpop.f32.mrb[0].mxu0
      %v732 = vand.u32 %v228, 4294901760
      %733 = vmatprep.mubr.f32.mxu0 %v732
      %v734 = vand.u32 %v227, 4294901760
      %735 = vmatmul.mubr.f32.gmra.mrb[0].mxu0 %v734
      %v736 = vpop.f32.mrb[0].mxu0
      %v737 = vadd.f32 %v636, %v736
      %v738 = vpop.f32.mrb[0].mxu0
      %v739 = vand.u32 %v230, 4294901760
      %740 = vmatprep.mubr.f32.mxu0 %v739
      %v741 = vand.u32 %v229, 4294901760
      %742 = vmatmul.mubr.f32.gmra.mrb[0].mxu0 %v741
      %v743 = vpop.f32.mrb[0].mxu0
      %v744 = vadd.f32 %v647, %v743
      %v745 = vpop.f32.mrb[0].mxu0
      %v746 = vand.u32 %v232, 4294901760
      %747 = vmatprep.mubr.f32.mxu0 %v746
      %v748 = vand.u32 %v231, 4294901760
      %749 = vmatmul.mubr.f32.gmra.mrb[0].mxu0 %v748
      %v750 = vpop.f32.mrb[0].mxu0
      %v751 = vadd.f32 %v658, %v750
      %v752 = vpop.f32.mrb[0].mxu0
      %753 = vdwg.mxu0
      %754 = vmatprep.subr.mxu0 0.0
      %755 = vmatpush1.msra.mxu0 1.0
      %756 = vmatprep.subr.mxu0 0.0
      %757 = vmatpush1.msra.mxu0 1.0
      %758 = vmatprep.subr.mxu0 0.0
      %759 = vmatpush1.msra.mxu0 1.0
      %760 = vmatprep.subr.mxu0 0.0
      %761 = vmatpush1.msra.mxu0 1.0
      %762 = vmatprep.subr.mxu0 0.0
      %763 = vmatpush1.msra.mxu0 1.0
      %764 = vmatprep.subr.mxu0 0.0
      %765 = vmatpush1.msra.mxu0 1.0
      %766 = vmatprep.subr.mxu0 0.0
      %767 = vmatpush1.msra.mxu0 1.0
      %768 = vmatprep.subr.mxu0 0.0
      %769 = vmatpush1.msra.mxu0 1.0
      %770 = vmatprep.subr.mxu0 0.0
      %771 = vmatpush1.msra.mxu0 1.0
      %772 = vmatprep.subr.mxu0 0.0
      %773 = vmatpush1.msra.mxu0 1.0
      %774 = vmatprep.subr.mxu0 0.0
      %775 = vmatpush1.msra.mxu0 1.0
      %776 = vmatprep.subr.mxu0 0.0
      %777 = vmatpush1.msra.mxu0 1.0
      %778 = vmatprep.subr.mxu0 0.0
      %779 = vmatpush1.msra.mxu0 1.0
      %780 = vmatprep.subr.mxu0 0.0
      %781 = vmatpush1.msra.mxu0 1.0
      %782 = vmatprep.subr.mxu0 0.0
      %783 = vmatpush1.msra.mxu0 1.0
      %784 = vmatprep.subr.mxu0 0.0
      %785 = vmatpush1.msra.mxu0 1.0
      %786 = vmatprep.subr.mxu0 0.0
      %787 = vmatpush1.msra.mxu0 1.0
      %788 = vmatprep.subr.mxu0 0.0
      %789 = vmatpush1.msra.mxu0 1.0
      %790 = vmatprep.subr.mxu0 0.0
      %791 = vmatpush1.msra.mxu0 1.0
      %792 = vmatprep.subr.mxu0 0.0
      %793 = vmatpush1.msra.mxu0 1.0
      %794 = vmatprep.subr.mxu0 0.0
      %795 = vmatpush1.msra.mxu0 1.0
      %796 = vmatprep.subr.mxu0 0.0
      %797 = vmatpush1.msra.mxu0 1.0
      %798 = vmatprep.subr.mxu0 0.0
      %799 = vmatpush1.msra.mxu0 1.0
      %800 = vmatprep.subr.mxu0 0.0
      %801 = vmatpush1.msra.mxu0 1.0
      %802 = vmatprep.subr.mxu0 0.0
      %803 = vmatpush1.msra.mxu0 1.0
      %804 = vmatprep.subr.mxu0 0.0
      %805 = vmatpush1.msra.mxu0 1.0
      %806 = vmatprep.subr.mxu0 0.0
      %807 = vmatpush1.msra.mxu0 1.0
      %808 = vmatprep.subr.mxu0 0.0
      %809 = vmatpush1.msra.mxu0 1.0
      %810 = vmatprep.subr.mxu0 0.0
      %811 = vmatpush1.msra.mxu0 1.0
      %812 = vmatprep.subr.mxu0 0.0
      %813 = vmatpush1.msra.mxu0 1.0
      %814 = vmatprep.subr.mxu0 0.0
      %815 = vmatpush1.msra.mxu0 1.0
      %816 = vmatprep.subr.mxu0 0.0
      %817 = vmatpush1.msra.mxu0 1.0
      %v818 = vand.u32 %v226, 4294901760
      %819 = vmatprep.mubr.f32.mxu0 %v818
      %v820 = vand.u32 %v225, 4294901760
      %821 = vmatmul.mubr.f32.gmra.mrb[0].mxu0 %v820
      %v822 = vpop.f32.mrb[0].mxu0
      %v823 = vadd.f32 %v730, %v822
      %v824 = vpop.f32.mrb[0].mxu0
      %v825 = vand.u32 %v228, 4294901760
      %826 = vmatprep.mubr.f32.mxu0 %v825
      %v827 = vand.u32 %v227, 4294901760
      %828 = vmatmul.mubr.f32.gmra.mrb[0].mxu0 %v827
      %v829 = vpop.f32.mrb[0].mxu0
      %v830 = vadd.f32 %v737, %v829
      %v831 = vpop.f32.mrb[0].mxu0
      %v832 = vand.u32 %v230, 4294901760
      %833 = vmatprep.mubr.f32.mxu0 %v832
      %v834 = vand.u32 %v229, 4294901760
      %835 = vmatmul.mubr.f32.gmra.mrb[0].mxu0 %v834
      %v836 = vpop.f32.mrb[0].mxu0
      %v837 = vadd.f32 %v744, %v836
      %v838 = vpop.f32.mrb[0].mxu0
      %v839 = vand.u32 %v232, 4294901760
      %840 = vmatprep.mubr.f32.mxu0 %v839
      %v841 = vand.u32 %v231, 4294901760
      %842 = vmatmul.mubr.f32.gmra.mrb[0].mxu0 %v841
      %v843 = vpop.f32.mrb[0].mxu0
      %v844 = vadd.f32 %v751, %v843
      %v845 = vpop.f32.mrb[0].mxu0
      %846 = vdwg.mxu0
      %v847 = vmul.f32 %v823, 0.00390625
      %v848 = vmul.f32 %v830, 0.00390625
      %v849 = vmul.f32 %v837, 0.00390625
      %v850 = vmul.f32 %v844, 0.00390625
      %v851 = vld [vmem:[%s1] sm:$0xff]
      %v852 = vld [vmem:[%s1 + $0x8] sm:$0xff]
      %v853 = vld [vmem:[%s1 + $0x10] sm:$0xff]
      %v854 = vld [vmem:[%s1 + $0x18] sm:$0xff]
      %v855 = vld [vmem:[%s2] sm:$0x1]
      %860 = vset.pattern.permute.xlu0 0
      %861 = vperm.xlu0 %860, %v847
      %v862 = vpop.permute.xlu0 %861
      %863 = vset.pattern.permute.xlu0 0
      %864 = vperm.xlu0 %863, %v848
      %v865 = vpop.permute.xlu0 %864
      %866 = vset.pattern.permute.xlu0 0
      %867 = vperm.xlu0 %866, %v849
      %v868 = vpop.permute.xlu0 %867
      %869 = vset.pattern.permute.xlu0 0
      %870 = vperm.xlu0 %869, %v850
      %v871 = vpop.permute.xlu0 %870
      %v872 = vlaneseq
      %v873 = vand.u32 %v872, 127
      %v874 = vlaneseq
      %v875 = vshrl.u32 %v874, 7
      %v876 = vsub.s32 %v873, %v875
      %v877 = vrot.slane %v862, %v876
      %v878 = vadd.s32 %v873, 4294967288
      %v879 = vlaneseq
      %v880 = vshrl.u32 %v879, 7
      %v881 = vsub.s32 %v878, %v880
      %v882 = vrot.slane %v865, %v881
      %vm883 = vcmask 130112
      %v884 = vsel %vm883, %v882, %v877
      %v885 = vadd.s32 %v873, 4294967280
      %v886 = vlaneseq
      %v887 = vshrl.u32 %v886, 7
      %v888 = vsub.s32 %v885, %v887
      %v889 = vrot.slane %v868, %v888
      %vm890 = vcmask 195712
      %v891 = vsel %vm890, %v889, %v884
      %v892 = vadd.s32 %v873, 4294967272
      %v893 = vlaneseq
      %v894 = vshrl.u32 %v893, 7
      %v895 = vsub.s32 %v892, %v894
      %v896 = vrot.slane %v871, %v895
      %vm897 = vcmask 261312
      %v898 = vsel %vm897, %v896, %v891
      %vm899 = vcmask 261120
      %v900 = vsel %vm899, %v898, 0
      %902 = vmatprep.subr.mxu0 0.0
      %903 = vmatpush1.msra.mxu0 %v851
      %904 = vmatprep.subr.mxu0 0.0
      %905 = vmatpush1.msra.mxu0 %v852
      %906 = vmatprep.subr.mxu0 0.0
      %907 = vmatpush1.msra.mxu0 %v853
      %908 = vmatprep.subr.mxu0 0.0
      %909 = vmatpush1.msra.mxu0 %v854
      %910 = vmatprep.subr.mxu0 0.0
      %911 = vmatpush1.msra.mxu0 0.0
      %912 = vmatprep.subr.mxu0 0.0
      %913 = vmatpush1.msra.mxu0 0.0
      %914 = vmatprep.subr.mxu0 0.0
      %915 = vmatpush1.msra.mxu0 0.0
      %916 = vmatprep.subr.mxu0 0.0
      %917 = vmatpush1.msra.mxu0 0.0
      %918 = vmatprep.subr.mxu0 0.0
      %919 = vmatpush1.msra.mxu0 0.0
      %920 = vmatprep.subr.mxu0 0.0
      %921 = vmatpush1.msra.mxu0 0.0
      %922 = vmatprep.subr.mxu0 0.0
      %923 = vmatpush1.msra.mxu0 0.0
      %924 = vmatprep.subr.mxu0 0.0
      %925 = vmatpush1.msra.mxu0 0.0
      %926 = vmatprep.subr.mxu0 0.0
      %927 = vmatpush1.msra.mxu0 0.0
      %928 = vmatprep.subr.mxu0 0.0
      %929 = vmatpush1.msra.mxu0 0.0
      %930 = vmatprep.subr.mxu0 0.0
      %931 = vmatpush1.msra.mxu0 0.0
      %932 = vmatprep.subr.mxu0 0.0
      %933 = vmatpush1.msra.mxu0 0.0
      %934 = vmatprep.subr.mxu0 0.0
      %935 = vmatpush1.msra.mxu0 0.0
      %936 = vmatprep.subr.mxu0 0.0
      %937 = vmatpush1.msra.mxu0 0.0
      %938 = vmatprep.subr.mxu0 0.0
      %939 = vmatpush1.msra.mxu0 0.0
      %940 = vmatprep.subr.mxu0 0.0
      %941 = vmatpush1.msra.mxu0 0.0
      %942 = vmatprep.subr.mxu0 0.0
      %943 = vmatpush1.msra.mxu0 0.0
      %944 = vmatprep.subr.mxu0 0.0
      %945 = vmatpush1.msra.mxu0 0.0
      %946 = vmatprep.subr.mxu0 0.0
      %947 = vmatpush1.msra.mxu0 0.0
      %948 = vmatprep.subr.mxu0 0.0
      %949 = vmatpush1.msra.mxu0 0.0
      %950 = vmatprep.subr.mxu0 0.0
      %951 = vmatpush1.msra.mxu0 0.0
      %952 = vmatprep.subr.mxu0 0.0
      %953 = vmatpush1.msra.mxu0 0.0
      %954 = vmatprep.subr.mxu0 0.0
      %955 = vmatpush1.msra.mxu0 0.0
      %956 = vmatprep.subr.mxu0 0.0
      %957 = vmatpush1.msra.mxu0 0.0
      %958 = vmatprep.subr.mxu0 0.0
      %959 = vmatpush1.msra.mxu0 0.0
      %960 = vmatprep.subr.mxu0 0.0
      %961 = vmatpush1.msra.mxu0 0.0
      %962 = vmatprep.subr.mxu0 0.0
      %963 = vmatpush1.msra.mxu0 0.0
      %964 = vmatprep.subr.mxu0 0.0
      %965 = vmatpush1.msra.mxu0 0.0
      %966 = vmatprep.mubr.f32.mxu0 0.0
      %967 = vmatmul.mubr.f32.gmra.mrb[0].mxu0 %v900
      %v968 = vpop.f32.mrb[0].mxu0
      %v969 = vadd.f32 %v855, %v968
      %v970 = vpop.f32.mrb[0].mxu0
      %971 = vdwg.mxu0
      %v972 = vmax.f32 %v969, 0.0
      %v973 = vld [vmem:[%s3] sm:$0x3]
      %v974 = vld [vmem:[%s4] sm:$0x1]
      %vm975 = vcmask 15360
      %v977 = vsel %vm975, %v972, 0
      %vm979 = vcmask 1041408
      %v981 = vsel %vm979, %v973, 0
      %983 = vmatprep.subr.mxu0 0.0
      %984 = vmatpush1.msra.mxu0 %v981
      %985 = vmatprep.subr.mxu0 0.0
      %986 = vmatpush1.msra.mxu0 0.0
      %987 = vmatprep.subr.mxu0 0.0
      %988 = vmatpush1.msra.mxu0 0.0
      %989 = vmatprep.subr.mxu0 0.0
      %990 = vmatpush1.msra.mxu0 0.0
      %991 = vmatprep.subr.mxu0 0.0
      %992 = vmatpush1.msra.mxu0 0.0
      %993 = vmatprep.subr.mxu0 0.0
      %994 = vmatpush1.msra.mxu0 0.0
      %995 = vmatprep.subr.mxu0 0.0
      %996 = vmatpush1.msra.mxu0 0.0
      %997 = vmatprep.subr.mxu0 0.0
      %998 = vmatpush1.msra.mxu0 0.0
      %999 = vmatprep.subr.mxu0 0.0
      %1000 = vmatpush1.msra.mxu0 0.0
      %1001 = vmatprep.subr.mxu0 0.0
      %1002 = vmatpush1.msra.mxu0 0.0
      %1003 = vmatprep.subr.mxu0 0.0
      %1004 = vmatpush1.msra.mxu0 0.0
      %1005 = vmatprep.subr.mxu0 0.0
      %1006 = vmatpush1.msra.mxu0 0.0
      %1007 = vmatprep.subr.mxu0 0.0
      %1008 = vmatpush1.msra.mxu0 0.0
      %1009 = vmatprep.subr.mxu0 0.0
      %1010 = vmatpush1.msra.mxu0 0.0
      %1011 = vmatprep.subr.mxu0 0.0
      %1012 = vmatpush1.msra.mxu0 0.0
      %1013 = vmatprep.subr.mxu0 0.0
      %1014 = vmatpush1.msra.mxu0 0.0
      %1015 = vmatprep.subr.mxu0 0.0
      %1016 = vmatpush1.msra.mxu0 0.0
      %1017 = vmatprep.subr.mxu0 0.0
      %1018 = vmatpush1.msra.mxu0 0.0
      %1019 = vmatprep.subr.mxu0 0.0
      %1020 = vmatpush1.msra.mxu0 0.0
      %1021 = vmatprep.subr.mxu0 0.0
      %1022 = vmatpush1.msra.mxu0 0.0
      %1023 = vmatprep.subr.mxu0 0.0
      %1024 = vmatpush1.msra.mxu0 0.0
      %1025 = vmatprep.subr.mxu0 0.0
      %1026 = vmatpush1.msra.mxu0 0.0
      %1027 = vmatprep.subr.mxu0 0.0
      %1028 = vmatpush1.msra.mxu0 0.0
      %1029 = vmatprep.subr.mxu0 0.0
      %1030 = vmatpush1.msra.mxu0 0.0
      %1031 = vmatprep.subr.mxu0 0.0
      %1032 = vmatpush1.msra.mxu0 0.0
      %1033 = vmatprep.subr.mxu0 0.0
      %1034 = vmatpush1.msra.mxu0 0.0
      %1035 = vmatprep.subr.mxu0 0.0
      %1036 = vmatpush1.msra.mxu0 0.0
      %1037 = vmatprep.subr.mxu0 0.0
      %1038 = vmatpush1.msra.mxu0 0.0
      %1039 = vmatprep.subr.mxu0 0.0
      %1040 = vmatpush1.msra.mxu0 0.0
      %1041 = vmatprep.subr.mxu0 0.0
      %1042 = vmatpush1.msra.mxu0 0.0
      %1043 = vmatprep.subr.mxu0 0.0
      %1044 = vmatpush1.msra.mxu0 0.0
      %1045 = vmatprep.subr.mxu0 0.0
      %1046 = vmatpush1.msra.mxu0 0.0
      %1047 = vmatprep.mubr.f32.mxu0 0.0
      %1048 = vmatmul.mubr.f32.gmra.mrb[0].mxu0 %v977
      %v1049 = vpop.f32.mrb[0].mxu0
      %v1050 = vadd.f32 %v974, %v1049
      %v1051 = vpop.f32.mrb[0].mxu0
      %1052 = vdwg.mxu0
      %v1053 = vxor.u32 %v1050, 2147483648
      %v1054 = vmul.f32 %v1053, 1.442695
      %v1055 = vpow.pop %v1054
      %v1056 = vadd.f32 %v1055, 1.0
      %v1057 = vrcp.pop %v1056
      %v1058 = vmul.f32 1.0, %v1057
      %v1059 = vlaneseq
      %v1060 = vshrl.u32 %v1059, 7
      %v1061 = vsub.s32 0, %v1060
      %v1062 = vrot.slane %v1058, %v1061
      %1064 = vbcast.lane.b32.xlu0 %v1062, 256
      %v1065 = vpop.permute.xlu0 %1064
      %s1067 = sor.u32 256, 8
      %1068 = vbcast.lane.b32.xlu0 %v1062, %s1067
      %v1069 = vpop.permute.xlu0 %1068
      %s1071 = sor.u32 256, 16
      %1072 = vbcast.lane.b32.xlu0 %v1062, %s1071
      %v1073 = vpop.permute.xlu0 %1072
      %s1075 = sor.u32 256, 24
      %1076 = vbcast.lane.b32.xlu0 %v1062, %s1075
      %v1077 = vpop.permute.xlu0 %1076
      %v1078 = vmul.f32 %v225, %v1065
      %v1079 = vmul.f32 %v226, %v1065
      %v1080 = vmul.f32 %v227, %v1069
      %v1081 = vmul.f32 %v228, %v1069
      %v1082 = vmul.f32 %v229, %v1073
      %v1083 = vmul.f32 %v230, %v1073
      %v1084 = vmul.f32 %v231, %v1077
      %v1085 = vmul.f32 %v232, %v1077
      %1086 = vst [vmem:[%s224] sm:$0xff] %v1078
      %1087 = vst [vmem:[%s224 + $0x8] sm:$0xff] %v1079
      %1088 = vst [vmem:[%s224 + $0x10] sm:$0xff] %v1080
      %1089 = vst [vmem:[%s224 + $0x18] sm:$0xff] %v1081
      %1090 = vst [vmem:[%s224 + $0x20] sm:$0xff] %v1082
      %1091 = vst [vmem:[%s224 + $0x28] sm:$0xff] %v1083
      %1092 = vst [vmem:[%s224 + $0x30] sm:$0xff] %v1084
      %1093 = vst [vmem:[%s224 + $0x38] sm:$0xff] %v1085
      %p1094 = scmp.lt.s32.totalorder %s16, 1
      %s1095 = scalar_select %p1094, %s16, 1
      %s1096 = smul.addr %s1095, 8
      %s1097 = smul.addr %s1096, 8
      %s1098 = scalar_lea.vmem %s5, %s1097
      // Predicated region
      $region41: #{se_block.1} parent=39 // pred_check
        %p1099 = pneg %p144
      $region42: #{se_block.1} parent=39 // pred_check_branch
        %1101 = sbr.rel (%p1099) target = $region44
      $region43: #{se_block.1} parent=39 // pred_region
        _
      $region44: #{se_block.1} parent=39 // pred_fallthru
        _
    $region40: #{se_block.1} parent=5 // pred_fallthru
      _
    %p1102 = scmp.le.s32.totalorder 2, %s11
    // Predicated region
    $region45: #{se_block.1} parent=5 // pred_check
      %p1103 = pneg %p1102
    $region46: #{se_block.1} parent=5 // pred_check_branch
      %1105 = sbr.rel (%p1103) target = $region48
    $region47: #{se_block.1} parent=5 // pred_region
      %s1106 = ssub.s32 %s11, 2
      // Predicated region
      $region49: #{se_block.1} parent=47 // pred_check
        %p1107 = pneg %p150
      $region50: #{se_block.1} parent=47 // pred_check_branch
        %1109 = sbr.rel (%p1107) target = $region52
      $region51: #{se_block.1} parent=47 // pred_region
        %p1110 = scmp.lt.s32.totalorder %s17, 1
        %s1111 = scalar_select %p1110, %s17, 1
        %s1112 = smul.addr %s1111, 8
        %s1113 = smul.addr %s1112, 8
        %s1114 = scalar_lea.vmem %s5, %s1113
      $region52: #{se_block.1} parent=47 // pred_fallthru
        _
    $region48: #{se_block.1} parent=5 // pred_fallthru
      _
  $region6: #{se_block.1} parent=0 // loop_footer
    %s15 = sadd.s32 1, %s11
  $region7: #{se_block.1} parent=0 // loop_footer_branch
    %10 = sbr.rel target = $region3
  $region8: #{se_block.1} parent=0 // loop_exit
    _

</llo_original>
